<compile_context>
chip_gen: v5e
topology: v5e:2x2
jax: 0.10.0
libtpu: 0.0.40
codegen_flags: <defaults>
</compile_context>

<pallas_src>
import jax
import jax.numpy as jnp
from jax.experimental import pallas as pl
from jax.experimental.pallas import tpu as pltpu


# ---------------------------------------------------------------------------
# Kernel
# ---------------------------------------------------------------------------
def _attention_gate_kernel(g_ref, x_ref, wg_ref, wx_ref, wpb_ref, o_ref):
    """Fused attention gate on one (1, Cin, T) spatial tile.

    g_ref, x_ref, o_ref : (1, Cin, T)    activations, spatial on lanes
    wg_ref, wx_ref      : (Cinter, Cin)  1x1 conv weights (OI layout)
    wpb_ref             : (Cinter, 3)    packed [bg+bx | wpsi | bpsi(bcast)]
    """
    g_blk = g_ref[0].astype(jnp.float32)           # (Cin, T)
    x_blk = x_ref[0].astype(jnp.float32)           # (Cin, T)

    # g1 + x1 + (bg + bx), ReLU: two small MXU matmuls with f32 accumulation.
    a = jnp.dot(wg_ref[...], g_blk, preferred_element_type=jnp.float32)
    a = a + jnp.dot(wx_ref[...], x_blk, preferred_element_type=jnp.float32)
    a = jnp.maximum(a + wpb_ref[:, 0:1], 0.0)      # (Cinter, T)

    # psi = sigmoid(wpsi . a + bpsi): VPU multiply + sublane (XLU) reduce.
    psi = jnp.sum(a * wpb_ref[:, 1:2], axis=0, keepdims=True) + wpb_ref[0:1, 2:3]
    psi = jax.nn.sigmoid(psi)                      # (1, T)

    # Gate the skip connection: broadcast psi over channels.
    o_ref[0] = (x_blk * psi).astype(o_ref.dtype)


# ---------------------------------------------------------------------------
# Tiling / VMEM budgeting
# ---------------------------------------------------------------------------
def _round_up(x, m):
    return (x + m - 1) // m * m


def _tile_byte_budget():
    """Per-activation-tile byte budget, generation aware (bigger on >=64MiB VMEM)."""
    try:
        cap = pltpu.get_tpu_info().vmem_capacity_bytes
    except Exception:  # pragma: no cover - be robust off-TPU / older jax
        cap = 0
    return (2 << 20) if cap >= (64 << 20) else (1 << 20)


def _choose_tile(cin, cinter, hw, io_itemsize, n_batch):
    """Pick spatial tile T (multiple of 128), padded extent, and a VMEM limit."""
    hw128 = _round_up(hw, 128)
    k = hw128 // 128                                   # number of 128-lane groups

    # Rough per-lane VMEM cost of one grid step:
    #   3 activation streams double-buffered + f32 in-kernel intermediates.
    per_lane_act = cin * io_itemsize
    per_lane_ws = 6 * per_lane_act + 4 * (3 * cin + 2 * cinter + 2)

    m_budget = max(1, _tile_byte_budget() // (per_lane_act * 128))   # bytes/tile cap
    m_vmem = max(1, (12 << 20) // (per_lane_ws * 128))               # v5e-safe WS cap
    m_hi = max(1, min(m_budget, m_vmem, k))
    m_lo = min(m_hi, max(1, (512 << 10) // (per_lane_act * 128)))    # >= ~512 KiB tile

    # Keep >= ~8 total grid steps (v7x: 2 TCs x >=4) unless that shrinks tiles
    # below the 512 KiB floor.
    s_min = max(1, -(-8 // n_batch))                   # ceil(8 / N)
    m_steps = max(1, k // s_min)
    m_want = max(m_lo, min(m_hi, m_steps))

    if hw % 128 == 0:
        # Choose a divisor of hw/128 -> T divides hw exactly, no padding copy.
        m = 1
        for d in range(1, m_want + 1):
            if k % d == 0:
                m = d
        t = m * 128
        hw_pad = hw
    else:
        t = m_want * 128
        hw_pad = _round_up(hw, t)

    ws = per_lane_ws * t + 4 * cinter * (2 * cin + 3) + 4096
    vmem_limit = int(min(max(2 * ws, 16 << 20), 48 << 20))
    return t, hw_pad, vmem_limit


# ---------------------------------------------------------------------------
# Wrapper
# ---------------------------------------------------------------------------
def attention_forward(params, g, x, *, io_dtype=None):
    """Matches AttentionModule.forward: NCHW in, NCHW out (x * psi).

    io_dtype: optional narrower dtype (e.g. jnp.bfloat16) for the g/x/out HBM
    streams; all arithmetic stays in f32.
    """
    N, C, H, W = x.shape
    Cinter = params["wg"].shape[0]
    hw = H * W

    io_dtype = jnp.dtype(io_dtype) if io_dtype is not None else jnp.dtype(x.dtype)
    itemsize = io_dtype.itemsize
    T, hw_pad, vmem_limit = _choose_tile(C, Cinter, hw, itemsize, N)
    grid = (N, hw_pad // T)

    g3 = g.reshape(N, C, hw).astype(io_dtype)
    x3 = x.reshape(N, C, hw).astype(io_dtype)
    if hw_pad != hw:
        pad = ((0, 0), (0, 0), (0, hw_pad - hw))
        g3 = jnp.pad(g3, pad)
        x3 = jnp.pad(x3, pad)

    # Fold bg+bx into one bias column and pack [bias | wpsi | bpsi] into a
    # single tiny VMEM stream (Cinter, 3).
    b1 = (params["bg"] + params["bx"]).reshape(Cinter, 1)
    wpsi_col = params["wpsi"].reshape(Cinter, 1)
    bpsi_col = jnp.broadcast_to(params["bpsi"].reshape(1, 1), (Cinter, 1))
    wpb = jnp.concatenate([b1, wpsi_col, bpsi_col], axis=1).astype(jnp.float32)

    flops = N * hw_pad * (4 * C * Cinter + 4 * Cinter + C + 2)
    bytes_accessed = (itemsize * 3 * N * C * hw_pad
                      + 4 * (2 * Cinter * C + 3 * Cinter))

    out = pl.pallas_call(
        _attention_gate_kernel,
        out_shape=jax.ShapeDtypeStruct((N, C, hw_pad), io_dtype),
        grid_spec=pltpu.PrefetchScalarGridSpec(
            num_scalar_prefetch=0,
            grid=grid,
            in_specs=[
                pl.BlockSpec((1, C, T), lambda n, s: (n, 0, s)),
                pl.BlockSpec((1, C, T), lambda n, s: (n, 0, s)),
                pl.BlockSpec((Cinter, C), lambda n, s: (0, 0)),
                pl.BlockSpec((Cinter, C), lambda n, s: (0, 0)),
                pl.BlockSpec((Cinter, 3), lambda n, s: (0, 0)),
            ],
            out_specs=pl.BlockSpec((1, C, T), lambda n, s: (n, 0, s)),
        ),
        compiler_params=pltpu.CompilerParams(
            dimension_semantics=("parallel", "parallel"),
            vmem_limit_bytes=vmem_limit,
        ),
        cost_estimate=pl.CostEstimate(
            flops=flops,
            transcendentals=2 * N * hw_pad,   # sigmoid ~ exp + reciprocal
            bytes_accessed=bytes_accessed,
        ),
    )(g3, x3,
      params["wg"].astype(jnp.float32),
      params["wx"].astype(jnp.float32),
      wpb)

    if hw_pad != hw:
        out = out[:, :, :hw]
    return out.reshape(N, C, H, W)


# ---------------------------------------------------------------------------
# Params init (PyTorch Conv2d-like) + pure-JAX reference
# ---------------------------------------------------------------------------
def init_attention_params(key, in_channels, inter_channels):
    """PyTorch-Conv2d-like uniform(-1/sqrt(fan_in), 1/sqrt(fan_in)) init."""

    def conv1x1_params(k, cin, cout):
        kw_, kb_ = jax.random.split(k)
        bound = 1.0 / jnp.sqrt(jnp.float32(cin))   # fan_in = cin * 1 * 1
        w = jax.random.uniform(kw_, (cout, cin), jnp.float32,
                               minval=-bound, maxval=bound)
        b = jax.random.uniform(kb_, (cout,), jnp.float32,
                               minval=-bound, maxval=bound)
        return w, b

    kg, kx, kp = jax.random.split(key, 3)
    wg, bg = conv1x1_params(kg, in_channels, inter_channels)
    wx, bx = conv1x1_params(kx, in_channels, inter_channels)
    wpsi, bpsi = conv1x1_params(kp, inter_channels, 1)
    return dict(wg=wg, bg=bg, wx=wx, bx=bx, wpsi=wpsi, bpsi=bpsi)


def attention_reference(params, g, x):
    """Pure-JAX reference (1x1 convs as channel einsums) for correctness."""

    def conv1x1(t, w, b):
        return jnp.einsum("oc,nchw->nohw", w, t) + b[None, :, None, None]

    g1 = conv1x1(g, params["wg"], params["bg"])
    x1 = conv1x1(x, params["wx"], params["bx"])
    psi = jax.nn.sigmoid(conv1x1(jnp.maximum(g1 + x1, 0.0),
                                 params["wpsi"], params["bpsi"]))
    return x * psi


if __name__ == "__main__":
    key = jax.random.PRNGKey(0)
    k_params, k_g, k_x = jax.random.split(key, 3)

    batch, in_channels, inter_channels, spatial = 2, 4, 8, 16
    params = init_attention_params(k_params, in_channels, inter_channels)
    g = jax.random.normal(k_g, (batch, in_channels, spatial, spatial), jnp.float32)
    x = jax.random.normal(k_x, (batch, in_channels, spatial, spatial), jnp.float32)

    # f32 I/O path (default) — must match the reference tightly.
    out = jax.block_until_ready(attention_forward(params, g, x))
    ref = jax.block_until_ready(attention_reference(params, g, x))
    assert out.shape == (batch, in_channels, spatial, spatial), out.shape
    assert jnp.allclose(out, ref, rtol=1e-4, atol=1e-5), "f32 mismatch vs reference"

    # bf16 I/O path (halved HBM traffic) — compare against the reference run on
    # the same bf16-quantized inputs; only the output cast differs.
    out_bf16 = jax.block_until_ready(
        attention_forward(params, g, x, io_dtype=jnp.bfloat16))
    ref_bf16 = attention_reference(
        params,
        g.astype(jnp.bfloat16).astype(jnp.float32),
        x.astype(jnp.bfloat16).astype(jnp.float32))
    assert jnp.allclose(out_bf16.astype(jnp.float32), ref_bf16,
                        rtol=2e-2, atol=2e-2), "bf16 mismatch vs reference"

    print("KERNEL_OK")
</pallas_src>

<mosaic_0001>
module attributes {stable_mosaic.version = 11 : i64} {
  func.func @_attention_gate_kernel(%arg0: i32, %arg1: i32, %arg2: memref<1x4x256xf32, #tpu.memory_space<vmem>>, %arg3: memref<1x4x256xf32, #tpu.memory_space<vmem>>, %arg4: memref<8x4xf32, #tpu.memory_space<vmem>>, %arg5: memref<8x4xf32, #tpu.memory_space<vmem>>, %arg6: memref<8x3xf32, #tpu.memory_space<vmem>>, %arg7: memref<1x4x256xf32, #tpu.memory_space<vmem>>) attributes {dimension_semantics = [#tpu.dimension_semantics<parallel>, #tpu.dimension_semantics<parallel>], iteration_bounds = array<i64: 2, 1>, scalar_prefetch = 0 : i64, scratch_operands = 0 : i64, tpu.core_type = #tpu.core_type<tc>, window_params = [{transform_indices = @transform_0, window_bounds = array<i64: 1, 4, 256>}, {transform_indices = @transform_1, window_bounds = array<i64: 1, 4, 256>}, {pipeline_mode = #tpu.pipeline_mode<synchronous>, transform_indices = @transform_2, window_bounds = array<i64: 8, 4>}, {pipeline_mode = #tpu.pipeline_mode<synchronous>, transform_indices = @transform_3, window_bounds = array<i64: 8, 4>}, {pipeline_mode = #tpu.pipeline_mode<synchronous>, transform_indices = @transform_4, window_bounds = array<i64: 8, 3>}, {transform_indices = @transform_5, window_bounds = array<i64: 1, 4, 256>}]} {
    %c0 = arith.constant 0 : index
    %c0_0 = arith.constant 0 : index
    %c0_1 = arith.constant 0 : index
    %0 = vector.load %arg2[%c0, %c0_0, %c0_1] : memref<1x4x256xf32, #tpu.memory_space<vmem>>, vector<1x4x256xf32>
    %1 = vector.shape_cast %0 : vector<1x4x256xf32> to vector<4x256xf32>
    %c0_2 = arith.constant 0 : index
    %c0_3 = arith.constant 0 : index
    %c0_4 = arith.constant 0 : index
    %2 = vector.load %arg3[%c0_2, %c0_3, %c0_4] : memref<1x4x256xf32, #tpu.memory_space<vmem>>, vector<1x4x256xf32>
    %3 = vector.shape_cast %2 : vector<1x4x256xf32> to vector<4x256xf32>
    %c0_5 = arith.constant 0 : index
    %c0_6 = arith.constant 0 : index
    %4 = vector.load %arg4[%c0_5, %c0_6] : memref<8x4xf32, #tpu.memory_space<vmem>>, vector<8x4xf32>
    %cst = arith.constant dense<0.000000e+00> : vector<8x256xf32>
    %5 = tpu.matmul %4, %1, %cst {dimension_numbers = #tpu.dot_dimension_numbers<[1], [0], [0], [1], [0, 0, 1, 1], [], []>} : vector<8x4xf32>, vector<4x256xf32>, vector<8x256xf32> -> vector<8x256xf32>
    %c0_7 = arith.constant 0 : index
    %c0_8 = arith.constant 0 : index
    %6 = vector.load %arg5[%c0_7, %c0_8] : memref<8x4xf32, #tpu.memory_space<vmem>>, vector<8x4xf32>
    %cst_9 = arith.constant dense<0.000000e+00> : vector<8x256xf32>
    %7 = tpu.matmul %6, %3, %cst_9 {dimension_numbers = #tpu.dot_dimension_numbers<[1], [0], [0], [1], [0, 0, 1, 1], [], []>} : vector<8x4xf32>, vector<4x256xf32>, vector<8x256xf32> -> vector<8x256xf32>
    %8 = arith.addf %5, %7 : vector<8x256xf32>
    %c0_10 = arith.constant 0 : index
    %c0_11 = arith.constant 0 : index
    %9 = vector.load %arg6[%c0_10, %c0_11] : memref<8x3xf32, #tpu.memory_space<vmem>>, vector<8x1xf32>
    %10 = vector.broadcast %9 : vector<8x1xf32> to vector<8x256xf32>
    %11 = arith.addf %8, %10 : vector<8x256xf32>
    %cst_12 = arith.constant 0.000000e+00 : f32
    %12 = vector.broadcast %cst_12 : f32 to vector<8x256xf32>
    %13 = arith.maximumf %11, %12 : vector<8x256xf32>
    %c0_13 = arith.constant 0 : index
    %c1 = arith.constant 1 : index
    %14 = vector.load %arg6[%c0_13, %c1] : memref<8x3xf32, #tpu.memory_space<vmem>>, vector<8x1xf32>
    %15 = vector.broadcast %14 : vector<8x1xf32> to vector<8x256xf32>
    %16 = arith.mulf %13, %15 : vector<8x256xf32>
    %cst_14 = arith.constant dense<0.000000e+00> : vector<256xf32>
    %17 = vector.multi_reduction <add>, %16, %cst_14 [0] : vector<8x256xf32> to vector<256xf32>
    %18 = vector.shape_cast %17 : vector<256xf32> to vector<1x256xf32>
    %c0_15 = arith.constant 0 : index
    %c2 = arith.constant 2 : index
    %19 = vector.load %arg6[%c0_15, %c2] : memref<8x3xf32, #tpu.memory_space<vmem>>, vector<1x1xf32>
    %20 = vector.broadcast %19 : vector<1x1xf32> to vector<1x256xf32>
    %21 = arith.addf %18, %20 : vector<1x256xf32>
    %22 = arith.negf %21 : vector<1x256xf32>
    %23 = math.exp %22 : vector<1x256xf32>
    %cst_16 = arith.constant 1.000000e+00 : f32
    %24 = vector.broadcast %cst_16 : f32 to vector<1x256xf32>
    %25 = arith.addf %24, %23 : vector<1x256xf32>
    %26 = arith.divf %24, %25 : vector<1x256xf32>
    %27 = vector.broadcast %26 : vector<1x256xf32> to vector<4x256xf32>
    %28 = arith.mulf %3, %27 : vector<4x256xf32>
    %c0_17 = arith.constant 0 : index
    %c0_18 = arith.constant 0 : index
    %c0_19 = arith.constant 0 : index
    %29 = vector.load %arg7[%c0_17, %c0_18, %c0_19] : memref<1x4x256xf32, #tpu.memory_space<vmem>>, vector<1x4x256xf32>
    %30 = vector.shape_cast %29 : vector<1x4x256xf32> to vector<4x256xf32>
    %31 = vector.shape_cast %28 : vector<4x256xf32> to vector<1x4x256xf32>
    tpu.vector_store %arg7[%c0_17, %c0_18, %c0_19], %31 {strides = array<i32>} : memref<1x4x256xf32, #tpu.memory_space<vmem>>, vector<1x4x256xf32>,
    return
  }
  func.func @transform_0(%arg0: i32, %arg1: i32) -> (i32, i32, i32) {
    %c0_i32 = arith.constant 0 : i32
    %c0_i32_0 = arith.constant 0 : i32
    return %arg0, %c0_i32, %arg1 : i32, i32, i32
  }
  func.func @transform_1(%arg0: i32, %arg1: i32) -> (i32, i32, i32) {
    %c0_i32 = arith.constant 0 : i32
    %c0_i32_0 = arith.constant 0 : i32
    return %arg0, %c0_i32, %arg1 : i32, i32, i32
  }
  func.func @transform_2(%arg0: i32, %arg1: i32) -> (i32, i32) {
    %c0_i32 = arith.constant 0 : i32
    %c0_i32_0 = arith.constant 0 : i32
    %c0_i32_1 = arith.constant 0 : i32
    return %c0_i32, %c0_i32_0 : i32, i32
  }
  func.func @transform_3(%arg0: i32, %arg1: i32) -> (i32, i32) {
    %c0_i32 = arith.constant 0 : i32
    %c0_i32_0 = arith.constant 0 : i32
    %c0_i32_1 = arith.constant 0 : i32
    return %c0_i32, %c0_i32_0 : i32, i32
  }
  func.func @transform_4(%arg0: i32, %arg1: i32) -> (i32, i32) {
    %c0_i32 = arith.constant 0 : i32
    %c0_i32_0 = arith.constant 0 : i32
    %c0_i32_1 = arith.constant 0 : i32
    return %c0_i32, %c0_i32_0 : i32, i32
  }
  func.func @transform_5(%arg0: i32, %arg1: i32) -> (i32, i32, i32) {
    %c0_i32 = arith.constant 0 : i32
    %c0_i32_0 = arith.constant 0 : i32
    return %arg0, %c0_i32, %arg1 : i32, i32, i32
  }
}

</mosaic_0001>

<llo_original>
// kernel: tpu_custom_call.1
$region0: #{tpu_custom_call.1}
  #allocation0 [shape = 'u32[]', space=smem, size = 0x4, offset = 0x4, fixed_abs, tag = 'smem constant byte address 0x4 - core index']
  #allocation1 [shape = 'u32[72,128]{1,0:T(1,128)}', space=vmem, size = 0x9000, scoped, tag = 'internal scratch']
  %s0 = inlined_call_operand.vmem [shape: f32[2,4,256], index: 0, kind: input, shape index: {}]
  %s1 = inlined_call_operand.vmem [shape: f32[2,4,256], index: 1, kind: input, shape index: {}]
  %s2 = inlined_call_operand.vmem [shape: f32[8,4], index: 2, kind: input, shape index: {}]
  %s3 = inlined_call_operand.vmem [shape: f32[8,4], index: 3, kind: input, shape index: {}]
  %s4 = inlined_call_operand.vmem [shape: f32[8,3], index: 4, kind: input, shape index: {}]
  %s5 = inlined_call_operand.hbm [shape: f32[2,4,256], index: 5, kind: output, shape index: {}]
  %s6 = sld [smem:[#allocation0]]
  $region53: #{tpu_custom_call.1} parent=0
    _
  %s8 = ssub.s32 1, %s6
  %s9 = scalar_select 0, %s8, %s6
  $region1: #{tpu_custom_call.1} parent=0
    #allocation2 [shape = 'u8[8192]{0}', space=vmem, size = 0x2000, scoped, tag = 'output window, operand 0']
    #allocation3 [shape = 's32[2]{0}', space=sflag, size = 0x8, scoped, tag = 'scoped memory for tpu_custom_call.1']
    %10 = vsyncpa [#allocation3], 0
    %s11 = scalar_lea.sflag [#allocation3], 1
    %12 = vsyncpa %s11, 0
    loop: start=0, step=1, limit=4
    $region2: #{tpu_custom_call.1} parent=1 // loop_pre_header
      _
    $region3: #{tpu_custom_call.1} parent=1 // loop_header
      %s14 = sphi 0, %s18
      %p15 = scmp.ge.s32.totalorder %s14, 4
      %s21 = sphi 0, %s33
      %s22 = sphi 0, %s29
      %s23 = sphi 0, %s21
      %s24 = sphi 0, %s22
      %s25 = sphi 0, %s23
      %s26 = sphi 0, %s24
      %s38 = sphi 0, %s40
      %s41 = sphi 0, %s38
      %s42 = sphi 0, %s41
      %s58 = sphi 0, %s42
      %s66 = sphi 0, %s68
      %s69 = sphi 0, %s66
      %s70 = sphi 0, %s69
      %s86 = sphi 0, %s70
      %s90 = sphi 0, %s90
      %s92 = sphi 0, %s90
      %s93 = sphi 0, %s92
      %s107 = sphi 0, %s93
      %s111 = sphi 0, %s111
      %s113 = sphi 0, %s111
      %s114 = sphi 0, %s113
      %s128 = sphi 0, %s114
      %s132 = sphi 0, %s132
      %s134 = sphi 0, %s132
      %s135 = sphi 0, %s134
      %s149 = sphi 0, %s135
      %s157 = sphi 0, %s159
      %s160 = sphi 0, %s157
      %s161 = sphi 0, %s160
      %s177 = sphi 0, %s161
    $region4: #{tpu_custom_call.1} parent=1 // loop_header_branch
      %17 = sbr.rel (%p15) target = $region8
    $region5: #{tpu_custom_call.1} parent=1 // loop_body
      %s19 = ssub.s32 %s14, 1
      %s20 = ssub.s32 %s14, 2
      %s27 = sadd.s32 1, %s22
      %p28 = scmp.ge.s32.totalorder %s27, 1
      %s29 = scalar_select %p28, 0, %s27
      %s30 = sadd.s32 1, %s21
      %s31 = scalar_select %p28, %s30, %s21
      %p32 = scmp.ge.s32.totalorder %s31, 2
      %s33 = scalar_select %p32, 0, %s31
      %s34 = ssub.s32 %s21, %s33
      %s35 = ssub.s32 %s22, %s29
      %s36 = sor.u32 %s34, %s35
      %p37 = scmp.eq.s32.totalorder %s36, 0
      %s39 = sadd.s32 %s38, 1
      %s40 = scalar_select %p37, %s38, %s39
      %p43 = pneg %p37
      %p44 = scmp.eq.s32.totalorder %s14, 1
      %p45 = por %p43, %p44
      %p46 = scmp.ne.s32.totalorder %s38, %s41
      %p47 = scmp.eq.s32.totalorder %s14, 0
      %p48 = por %p46, %p47
      %p49 = scmp.ne.s32.totalorder %s38, %s41
      %p50 = scmp.eq.s32.totalorder %s19, 1
      %p51 = por %p49, %p50
      %p52 = scmp.ne.s32.totalorder %s41, %s42
      %p53 = scmp.eq.s32.totalorder %s19, 0
      %p54 = por %p52, %p53
      %p55 = scmp.ne.s32.totalorder %s41, %s42
      %p56 = scmp.eq.s32.totalorder %s20, 1
      %p57 = por %p55, %p56
      %p59 = scmp.ne.s32.totalorder %s42, %s58
      %p60 = scmp.eq.s32.totalorder %s20, 0
      %p61 = por %p59, %p60
      %s62 = ssub.s32 %s21, %s33
      %s63 = ssub.s32 %s22, %s29
      %s64 = sor.u32 %s62, %s63
      %p65 = scmp.eq.s32.totalorder %s64, 0
      %s67 = sadd.s32 %s66, 1
      %s68 = scalar_select %p65, %s66, %s67
      %p71 = pneg %p65
      %p72 = scmp.eq.s32.totalorder %s14, 1
      %p73 = por %p71, %p72
      %p74 = scmp.ne.s32.totalorder %s66, %s69
      %p75 = scmp.eq.s32.totalorder %s14, 0
      %p76 = por %p74, %p75
      %p77 = scmp.ne.s32.totalorder %s66, %s69
      %p78 = scmp.eq.s32.totalorder %s19, 1
      %p79 = por %p77, %p78
      %p80 = scmp.ne.s32.totalorder %s69, %s70
      %p81 = scmp.eq.s32.totalorder %s19, 0
      %p82 = por %p80, %p81
      %p83 = scmp.ne.s32.totalorder %s69, %s70
      %p84 = scmp.eq.s32.totalorder %s20, 1
      %p85 = por %p83, %p84
      %p87 = scmp.ne.s32.totalorder %s70, %s86
      %p88 = scmp.eq.s32.totalorder %s20, 0
      %p89 = por %p87, %p88
      %s91 = sadd.s32 %s90, 1
      %p94 = scmp.eq.s32.totalorder %s14, 1
      %p95 = scmp.ne.s32.totalorder %s90, %s92
      %p96 = scmp.eq.s32.totalorder %s14, 0
      %p97 = por %p95, %p96
      %p98 = scmp.ne.s32.totalorder %s90, %s92
      %p99 = scmp.eq.s32.totalorder %s19, 1
      %p100 = por %p98, %p99
      %p101 = scmp.ne.s32.totalorder %s92, %s93
      %p102 = scmp.eq.s32.totalorder %s19, 0
      %p103 = por %p101, %p102
      %p104 = scmp.ne.s32.totalorder %s92, %s93
      %p105 = scmp.eq.s32.totalorder %s20, 1
      %p106 = por %p104, %p105
      %p108 = scmp.ne.s32.totalorder %s93, %s107
      %p109 = scmp.eq.s32.totalorder %s20, 0
      %p110 = por %p108, %p109
      %s112 = sadd.s32 %s111, 1
      %p115 = scmp.eq.s32.totalorder %s14, 1
      %p116 = scmp.ne.s32.totalorder %s111, %s113
      %p117 = scmp.eq.s32.totalorder %s14, 0
      %p118 = por %p116, %p117
      %p119 = scmp.ne.s32.totalorder %s111, %s113
      %p120 = scmp.eq.s32.totalorder %s19, 1
      %p121 = por %p119, %p120
      %p122 = scmp.ne.s32.totalorder %s113, %s114
      %p123 = scmp.eq.s32.totalorder %s19, 0
      %p124 = por %p122, %p123
      %p125 = scmp.ne.s32.totalorder %s113, %s114
      %p126 = scmp.eq.s32.totalorder %s20, 1
      %p127 = por %p125, %p126
      %p129 = scmp.ne.s32.totalorder %s114, %s128
      %p130 = scmp.eq.s32.totalorder %s20, 0
      %p131 = por %p129, %p130
      %s133 = sadd.s32 %s132, 1
      %p136 = scmp.eq.s32.totalorder %s14, 1
      %p137 = scmp.ne.s32.totalorder %s132, %s134
      %p138 = scmp.eq.s32.totalorder %s14, 0
      %p139 = por %p137, %p138
      %p140 = scmp.ne.s32.totalorder %s132, %s134
      %p141 = scmp.eq.s32.totalorder %s19, 1
      %p142 = por %p140, %p141
      %p143 = scmp.ne.s32.totalorder %s134, %s135
      %p144 = scmp.eq.s32.totalorder %s19, 0
      %p145 = por %p143, %p144
      %p146 = scmp.ne.s32.totalorder %s134, %s135
      %p147 = scmp.eq.s32.totalorder %s20, 1
      %p148 = por %p146, %p147
      %p150 = scmp.ne.s32.totalorder %s135, %s149
      %p151 = scmp.eq.s32.totalorder %s20, 0
      %p152 = por %p150, %p151
      %s153 = ssub.s32 %s21, %s33
      %s154 = ssub.s32 %s22, %s29
      %s155 = sor.u32 %s153, %s154
      %p156 = scmp.eq.s32.totalorder %s155, 0
      %s158 = sadd.s32 %s157, 1
      %s159 = scalar_select %p156, %s157, %s158
      %p162 = pneg %p156
      %p163 = scmp.eq.s32.totalorder %s14, 1
      %p164 = por %p162, %p163
      %p165 = scmp.ne.s32.totalorder %s157, %s160
      %p166 = scmp.eq.s32.totalorder %s14, 0
      %p167 = por %p165, %p166
      %p168 = scmp.ne.s32.totalorder %s157, %s160
      %p169 = scmp.eq.s32.totalorder %s19, 1
      %p170 = por %p168, %p169
      %p171 = scmp.ne.s32.totalorder %s160, %s161
      %p172 = scmp.eq.s32.totalorder %s19, 0
      %p173 = por %p171, %p172
      %p174 = scmp.ne.s32.totalorder %s160, %s161
      %p175 = scmp.eq.s32.totalorder %s20, 1
      %p176 = por %p174, %p175
      %p178 = scmp.ne.s32.totalorder %s161, %s177
      %p179 = scmp.eq.s32.totalorder %s20, 0
      %p180 = por %p178, %p179
      %p181 = scmp.le.s32.totalorder 1, %s14
      %p182 = scmp.lt.s32.totalorder %s14, 3
      %p183 = pnand %p181, %p182
      %p184 = pneg %p183
      // Predicated region
      $region9: #{tpu_custom_call.1} parent=5 // pred_check
        _
      $region10: #{tpu_custom_call.1} parent=5 // pred_check_branch
        %186 = sbr.rel (%p183) target = $region12
      $region11: #{tpu_custom_call.1} parent=5 // pred_region
        %s187 = ssub.s32 %s14, 1
        // Predicated region
        $region13: #{tpu_custom_call.1} parent=11 // pred_check
          %p188 = pneg %p103
        $region14: #{tpu_custom_call.1} parent=11 // pred_check_branch
          %190 = sbr.rel (%p188) target = $region16
        $region15: #{tpu_custom_call.1} parent=11 // pred_region
          _
        $region16: #{tpu_custom_call.1} parent=11 // pred_fallthru
          _
        // Predicated region
        $region17: #{tpu_custom_call.1} parent=11 // pred_check
          %p191 = pneg %p124
        $region18: #{tpu_custom_call.1} parent=11 // pred_check_branch
          %193 = sbr.rel (%p191) target = $region20
        $region19: #{tpu_custom_call.1} parent=11 // pred_region
          _
        $region20: #{tpu_custom_call.1} parent=11 // pred_fallthru
          _
        // Predicated region
        $region21: #{tpu_custom_call.1} parent=11 // pred_check
          %p194 = pneg %p145
        $region22: #{tpu_custom_call.1} parent=11 // pred_check_branch
          %196 = sbr.rel (%p194) target = $region24
        $region23: #{tpu_custom_call.1} parent=11 // pred_region
          _
        $region24: #{tpu_custom_call.1} parent=11 // pred_fallthru
          _
      $region12: #{tpu_custom_call.1} parent=5 // pred_fallthru
        _
      %p197 = scmp.lt.s32.totalorder %s14, 2
      // Predicated region
      $region25: #{tpu_custom_call.1} parent=5 // pred_check
        %p198 = pneg %p197
      $region26: #{tpu_custom_call.1} parent=5 // pred_check_branch
        %200 = sbr.rel (%p198) target = $region28
      $region27: #{tpu_custom_call.1} parent=5 // pred_region
        // Predicated region
        $region29: #{tpu_custom_call.1} parent=27 // pred_check
          %p201 = pneg %p48
        $region30: #{tpu_custom_call.1} parent=27 // pred_check_branch
          %203 = sbr.rel (%p201) target = $region32
        $region31: #{tpu_custom_call.1} parent=27 // pred_region
          %s204 = smul.u32 2, %s22
          %p205 = scmp.lt.s32.totalorder %s21, 1
          %s206 = scalar_select %p205, %s21, 1
          %p207 = scmp.lt.s32.totalorder %s204, 1
          %s208 = scalar_select %p207, %s204, 1
          %s209 = smul.addr %s206, 2
          %s210 = sadd.s32 %s208, %s209
          %s211 = smul.addr %s210, 4
          %s212 = scalar_lea.vmem %s0, %s211
          %s213 = smul.u32 2, %s22
        $region32: #{tpu_custom_call.1} parent=27 // pred_fallthru
          _
        // Predicated region
        $region33: #{tpu_custom_call.1} parent=27 // pred_check
          %p214 = pneg %p76
        $region34: #{tpu_custom_call.1} parent=27 // pred_check_branch
          %216 = sbr.rel (%p214) target = $region36
        $region35: #{tpu_custom_call.1} parent=27 // pred_region
          %s217 = smul.u32 2, %s22
          %p218 = scmp.lt.s32.totalorder %s21, 1
          %s219 = scalar_select %p218, %s21, 1
          %p220 = scmp.lt.s32.totalorder %s217, 1
          %s221 = scalar_select %p220, %s217, 1
          %s222 = smul.addr %s219, 2
          %s223 = sadd.s32 %s221, %s222
          %s224 = smul.addr %s223, 4
          %s225 = scalar_lea.vmem %s1, %s224
          %s226 = smul.u32 2, %s22
        $region36: #{tpu_custom_call.1} parent=27 // pred_fallthru
          _
      $region28: #{tpu_custom_call.1} parent=5 // pred_fallthru
        _
      %p227 = scmp.le.s32.totalorder 1, %s14
      %p228 = scmp.lt.s32.totalorder %s14, 3
      %p229 = pnand %p227, %p228
      %p230 = pneg %p229
      // Predicated region
      $region37: #{tpu_custom_call.1} parent=5 // pred_check
        _
      $region38: #{tpu_custom_call.1} parent=5 // pred_check_branch
        %232 = sbr.rel (%p229) target = $region40
      $region39: #{tpu_custom_call.1} parent=5 // pred_region
        %s233 = ssub.s32 %s14, 1
        %s234 = smul.u32 2, %s24
        %p235 = scmp.lt.s32.totalorder %s23, 1
        %s236 = scalar_select %p235, %s23, 1
        %p237 = scmp.lt.s32.totalorder %s234, 1
        %s238 = scalar_select %p237, %s234, 1
        %s239 = smul.addr %s236, 2
        %s240 = sadd.s32 %s238, %s239
        %s241 = smul.addr %s240, 4
        %s242 = scalar_lea.vmem %s0, %s241
        %p243 = pneg %p54
        %p244 = pneg %p51
        %s245 = smul.u32 2, %s24
        %p246 = scmp.lt.s32.totalorder %s23, 1
        %s247 = scalar_select %p246, %s23, 1
        %p248 = scmp.lt.s32.totalorder %s245, 1
        %s249 = scalar_select %p248, %s245, 1
        %s250 = smul.addr %s247, 2
        %s251 = sadd.s32 %s249, %s250
        %s252 = smul.addr %s251, 4
        %s253 = scalar_lea.vmem %s1, %s252
        %p254 = pneg %p82
        %p255 = pneg %p79
        %p256 = pneg %p103
        %p257 = pneg %p100
        %p258 = pneg %p124
        %p259 = pneg %p121
        %p260 = pneg %p145
        %p261 = pneg %p142
        %p262 = pneg %p173
        %p263 = pneg %p170
        %s264 = sand.u32 %s160, 1
        %s265 = scalar_lea.sflag [#allocation3], %s264
        %s266 = sand.u32 %s160, 1
        %s267 = smul.addr %s266, 8
        %s268 = scalar_lea.vmem [#allocation2], %s267
        %s269 = smul.u32 2, %s24
        %p270 = scmp.lt.s32.totalorder %s23, 1
        %s271 = scalar_select %p270, %s23, 1
        %p272 = scmp.lt.s32.totalorder %s269, 1
        %s273 = scalar_select %p272, %s269, 1
        %s274 = smul.addr %s271, 2
        %s275 = sadd.s32 %s273, %s274
        %s276 = smul.addr %s275, 4
        %s277 = scalar_lea.vmem %s0, %s276
        %s278 = smul.u32 2, %s24
        %s279 = smul.u32 2, %s24
        %p280 = scmp.lt.s32.totalorder %s23, 1
        %s281 = scalar_select %p280, %s23, 1
        %p282 = scmp.lt.s32.totalorder %s279, 1
        %s283 = scalar_select %p282, %s279, 1
        %s284 = smul.addr %s281, 2
        %s285 = sadd.s32 %s283, %s284
        %s286 = smul.addr %s285, 4
        %s287 = scalar_lea.vmem %s1, %s286
        %s288 = smul.u32 2, %s24
        %s289 = smul.u32 2, %s24
        %v290 = vld [vmem:[%s277] sm:$0xff]
        %v291 = vld [vmem:[%s287] sm:$0xff]
        %v292 = vld [vmem:[%s2] sm:$0xff]
        %v293 = vld [vmem:[%s3] sm:$0xff]
        %295 = vst [vmem:[#allocation1] ss:$2 sm:$0xff] %v291
        %v296 = vld.sshfl [vmem:[#allocation1] sm:$0xff pattern:$0x75316420]
        %v297 = vld.sshfl [vmem:[#allocation1 + $0x8] sm:$0xff pattern:$0x75316420]
        %vm298 = vcmask 31744
        %v300 = vsel %vm298, %v293, 0
        %vm302 = vcmask 1043456
        %v303 = vsel %vm302, %v296, 0
        %v305 = vsel %vm302, %v297, 0
        %307 = vmatpush.msra.mxu0 0.0
        %308 = vmatpush.msra.mxu0 0.0
        %309 = vmatpush.msra.mxu0 0.0
        %310 = vmatpush.msra.mxu0 0.0
        %311 = vmatpush.msra.mxu0 0.0
        %312 = vmatpush.msra.mxu0 0.0
        %313 = vmatpush.msra.mxu0 0.0
        %314 = vmatpush.msra.mxu0 0.0
        %315 = vmatpush.msra.mxu0 0.0
        %316 = vmatpush.msra.mxu0 0.0
        %317 = vmatpush.msra.mxu0 0.0
        %318 = vmatpush.msra.mxu0 0.0
        %319 = vmatpush.msra.mxu0 0.0
        %320 = vmatpush.msra.mxu0 0.0
        %321 = vmatpush.msra.mxu0 0.0
        %322 = vmatpush.msra.mxu0 %v303
        %323 = vmatmul.f32.gmra.mxu0 %v300
        %v324 = vpop.f32.mrf.mxu0
        %v325 = vadd.f32 0.0, %v324
        %326 = vdwg.mxu0
        %327 = vmatpush.msra.mxu0 0.0
        %328 = vmatpush.msra.mxu0 0.0
        %329 = vmatpush.msra.mxu0 0.0
        %330 = vmatpush.msra.mxu0 0.0
        %331 = vmatpush.msra.mxu0 0.0
        %332 = vmatpush.msra.mxu0 0.0
        %333 = vmatpush.msra.mxu0 0.0
        %334 = vmatpush.msra.mxu0 0.0
        %335 = vmatpush.msra.mxu0 0.0
        %336 = vmatpush.msra.mxu0 0.0
        %337 = vmatpush.msra.mxu0 0.0
        %338 = vmatpush.msra.mxu0 0.0
        %339 = vmatpush.msra.mxu0 0.0
        %340 = vmatpush.msra.mxu0 0.0
        %341 = vmatpush.msra.mxu0 0.0
        %342 = vmatpush.msra.mxu0 %v305
        %343 = vmatmul.f32.gmra.mxu0 %v300
        %v344 = vpop.f32.mrf.mxu0
        %v345 = vadd.f32 0.0, %v344
        %346 = vdwg.mxu0
        %348 = vst [vmem:[#allocation1] ss:$2 sm:$0xff] %v290
        %v349 = vld.sshfl [vmem:[#allocation1] sm:$0xff pattern:$0x75316420]
        %v350 = vld.sshfl [vmem:[#allocation1 + $0x8] sm:$0xff pattern:$0x75316420]
        %v352 = vsel %vm298, %v292, 0
        %v354 = vsel %vm302, %v349, 0
        %v356 = vsel %vm302, %v350, 0
        %358 = vmatpush.msra.mxu0 0.0
        %359 = vmatpush.msra.mxu0 0.0
        %360 = vmatpush.msra.mxu0 0.0
        %361 = vmatpush.msra.mxu0 0.0
        %362 = vmatpush.msra.mxu0 0.0
        %363 = vmatpush.msra.mxu0 0.0
        %364 = vmatpush.msra.mxu0 0.0
        %365 = vmatpush.msra.mxu0 0.0
        %366 = vmatpush.msra.mxu0 0.0
        %367 = vmatpush.msra.mxu0 0.0
        %368 = vmatpush.msra.mxu0 0.0
        %369 = vmatpush.msra.mxu0 0.0
        %370 = vmatpush.msra.mxu0 0.0
        %371 = vmatpush.msra.mxu0 0.0
        %372 = vmatpush.msra.mxu0 0.0
        %373 = vmatpush.msra.mxu0 %v354
        %374 = vmatmul.f32.gmra.mxu0 %v352
        %v375 = vpop.f32.mrf.mxu0
        %v376 = vadd.f32 %v325, %v375
        %377 = vdwg.mxu0
        %378 = vmatpush.msra.mxu0 0.0
        %379 = vmatpush.msra.mxu0 0.0
        %380 = vmatpush.msra.mxu0 0.0
        %381 = vmatpush.msra.mxu0 0.0
        %382 = vmatpush.msra.mxu0 0.0
        %383 = vmatpush.msra.mxu0 0.0
        %384 = vmatpush.msra.mxu0 0.0
        %385 = vmatpush.msra.mxu0 0.0
        %386 = vmatpush.msra.mxu0 0.0
        %387 = vmatpush.msra.mxu0 0.0
        %388 = vmatpush.msra.mxu0 0.0
        %389 = vmatpush.msra.mxu0 0.0
        %390 = vmatpush.msra.mxu0 0.0
        %391 = vmatpush.msra.mxu0 0.0
        %392 = vmatpush.msra.mxu0 0.0
        %393 = vmatpush.msra.mxu0 %v356
        %394 = vmatmul.f32.gmra.mxu0 %v352
        %v395 = vpop.f32.mrf.mxu0
        %v396 = vadd.f32 %v345, %v395
        %397 = vdwg.mxu0
        %v398 = vld [vmem:[%s4] sm:$0xff]
        %400 = vset.pattern.permute.xlu0 0
        %401 = vperm.xlu0 %400, %v398
        %v402 = vpop.permute.xlu0 %401
        %v404 = vadd.f32 %v376, %v402
        %v405 = vadd.f32 %v396, %v402
        %v406 = vmax.f32 %v404, 0.0
        %v407 = vmax.f32 %v405, 0.0
        %408 = vset.pattern.permute.xlu0 1
        %409 = vperm.xlu0 %408, %v398
        %v410 = vpop.permute.xlu0 %409
        %v412 = vmul.f32 %v406, %v410
        %v413 = vmul.f32 %v407, %v410
        %v414 = vrot.slane %v412, 4
        %v415 = vadd.f32 %v412, %v414
        %v416 = vrot.slane %v415, 2
        %v417 = vadd.f32 %v415, %v416
        %v418 = vrot.slane %v417, 1
        %v419 = vadd.f32 %v417, %v418
        %v420 = vrot.slane %v413, 4
        %v421 = vadd.f32 %v413, %v420
        %v422 = vrot.slane %v421, 2
        %v423 = vadd.f32 %v421, %v422
        %v424 = vrot.slane %v423, 1
        %v425 = vadd.f32 %v423, %v424
        %v426 = vld [vmem:[%s4] sm:$0x1]
        %428 = vset.pattern.permute.xlu0 2
        %429 = vperm.xlu0 %428, %v426
        %v430 = vpop.permute.xlu0 %429
        %v432 = vadd.f32 %v419, %v430
        %v433 = vadd.f32 %v425, %v430
        %v434 = vxor.u32 %v432, 2147483648
        %v435 = vxor.u32 %v433, 2147483648
        %v436 = vmul.f32 %v434, 1.442695
        %v437 = vpow.pop %v436
        %v438 = vmul.f32 %v435, 1.442695
        %v439 = vpow.pop %v438
        %v440 = vadd.f32 %v437, 1.0
        %v441 = vadd.f32 %v439, 1.0
        %v442 = vrcp.pop %v440
        %v443 = vmul.f32 %v440, %v442
        %v444 = vsub.f32 1.0, %v443
        %v445 = vmul.f32 %v442, %v444
        %v446 = vadd.f32 %v442, %v445
        %vm447 = vweird.f32 %v440
        %vm448 = vweird.f32 %v442
        %vm449 = vmor %vm447, %vm448
        %v450 = vsel %vm449, %v442, %v446
        %v451 = vand.u32 2147483647, %v440
        %vm452 = vcmp.eq.f32.partialorder %v451, 8.507059e+37
        %v453 = vand.u32 %v440, 2147483648
        %v454 = vor.u32 1.1754944e-38, %v453
        %v455 = vsel %vm452, %v454, %v450
        %v456 = vmul.f32 1.0, %v455
        %v457 = vrcp.pop %v441
        %v458 = vmul.f32 %v441, %v457
        %v459 = vsub.f32 1.0, %v458
        %v460 = vmul.f32 %v457, %v459
        %v461 = vadd.f32 %v457, %v460
        %vm462 = vweird.f32 %v441
        %vm463 = vweird.f32 %v457
        %vm464 = vmor %vm462, %vm463
        %v465 = vsel %vm464, %v457, %v461
        %v466 = vand.u32 2147483647, %v441
        %vm467 = vcmp.eq.f32.partialorder %v466, 8.507059e+37
        %v468 = vand.u32 %v441, 2147483648
        %v469 = vor.u32 1.1754944e-38, %v468
        %v470 = vsel %vm467, %v469, %v465
        %v471 = vmul.f32 1.0, %v470
        %v472 = vperm.slane %v456, 0
        %v473 = vperm.slane %v471, 0
        %v476 = vrot.slane %v473, 4
        %v477 = vsel %vm302, %v472, %v476
        %v479 = vmul.f32 %v291, %v477
        %480 = vst [vmem:[%s268] sm:$0xff] %v479
        %s481 = sand.u32 %s160, 1
        %s482 = scalar_lea.sflag [#allocation3], %s481
        %s483 = sand.u32 %s160, 1
        %s484 = smul.addr %s483, 8
        %s485 = scalar_lea.vmem [#allocation2], %s484
        // Predicated region
        $region41: #{tpu_custom_call.1} parent=39 // pred_check
          %p486 = pneg %p170
        $region42: #{tpu_custom_call.1} parent=39 // pred_check_branch
          %488 = sbr.rel (%p486) target = $region44
        $region43: #{tpu_custom_call.1} parent=39 // pred_region
          %s489 = smul.u32 2, %s24
          %491 = vsyncadd %s482, 0
          %s492 = smul.addr %s23, 2
          %s493 = sadd.s32 %s489, %s492
          %s494 = smul.addr %s493, 4
          %s495 = scalar_lea.hbm %s5, %s494
          %s497 = sshll.u32 %s485, 4
          %s498 = int_to_ptr.vmem [resolvable:$true] %s497
          %s499 = sshll.u32 %s495, 4
          %s500 = int_to_ptr.hbm [resolvable:$true] %s499
          %502 = dma.vmem_to_hbm [thread:$0]  %s498, 128, %s500, %s482
        $region44: #{tpu_custom_call.1} parent=39 // pred_fallthru
          _
      $region40: #{tpu_custom_call.1} parent=5 // pred_fallthru
        _
      %p503 = scmp.le.s32.totalorder 2, %s14
      // Predicated region
      $region45: #{tpu_custom_call.1} parent=5 // pred_check
        %p504 = pneg %p503
      $region46: #{tpu_custom_call.1} parent=5 // pred_check_branch
        %506 = sbr.rel (%p504) target = $region48
      $region47: #{tpu_custom_call.1} parent=5 // pred_region
        %s507 = ssub.s32 %s14, 2
        // Predicated region
        $region49: #{tpu_custom_call.1} parent=47 // pred_check
          %p508 = pneg %p176
        $region50: #{tpu_custom_call.1} parent=47 // pred_check_branch
          %510 = sbr.rel (%p508) target = $region52
        $region51: #{tpu_custom_call.1} parent=47 // pred_region
          %s511 = sand.u32 %s161, 1
          %s512 = scalar_lea.sflag [#allocation3], %s511
          %s513 = sand.u32 %s161, 1
          %s514 = smul.addr %s513, 8
          %s515 = scalar_lea.vmem [#allocation2], %s514
          %517 = dma.done %s512, 128
        $region52: #{tpu_custom_call.1} parent=47 // pred_fallthru
          _
      $region48: #{tpu_custom_call.1} parent=5 // pred_fallthru
        _
    $region6: #{tpu_custom_call.1} parent=1 // loop_footer
      %s18 = sadd.s32 1, %s14
    $region7: #{tpu_custom_call.1} parent=1 // loop_footer_branch
      %13 = sbr.rel target = $region3
    $region8: #{tpu_custom_call.1} parent=1 // loop_exit
      _
    %518 = vsyncpa [#allocation3], 1
    %s519 = scalar_lea.sflag [#allocation3], 1
    %520 = vsyncpa %s519, 1

</llo_original>
